<compile_context>
chip_gen: v7x
topology: tpu7x:2x2x1
jax: 0.10.0
libtpu: 0.0.40
codegen_flags: <defaults>
</compile_context>

<pallas_src>
import functools

import jax
import jax.numpy as jnp
from jax.experimental import pallas as pl
from jax.experimental.pallas import tpu as pltpu


def _dwconv_bn_relu_kernel(x_ref, w_ref, b_ref, o_ref, *, ksize, th, wo_pad):
    # x_ref: (H_in_pad, W_in_pad, CB) full-height input strip for this
    #        (batch, channel-chunk); its block index does not depend on the
    #        h-tile grid axis, so it stays resident in VMEM across all row
    #        tiles (no halo re-DMA).
    # w_ref: (K, K, CB)   depthwise weights with BN scale folded in.
    # b_ref: (1, CB)      folded BN bias.
    # o_ref: (TH, WO_pad, CB) output row tile (lane-dense, 8-sublane aligned).
    cb = o_ref.shape[-1]
    row0 = pl.program_id(2) * th

    # Hoist small loads / casts / broadcasts out of the row loop.
    w_f32 = w_ref[...].astype(jnp.float32)                        # (K, K, CB)
    bias_row = jnp.broadcast_to(b_ref[...].astype(jnp.float32), (wo_pad, cb))

    # One output row at a time: accumulator stays register-resident while the
    # grid step still amortizes its ~0.35us overhead over TH rows of work.
    @pl.loop(0, th)
    def _(r):
        acc = bias_row                                            # bias pre-init
        for kh in range(ksize):                                   # static
            # Single full-width load per kh; cast hoisted to the row load
            # (matters if bf16 storage is used).
            row_kh = x_ref[row0 + r + kh].astype(jnp.float32)     # (W_in_pad, CB)
            for kw in range(ksize):                               # static
                # kw shift = register-level static slice (no per-tap ref load).
                acc = acc + row_kh[kw:kw + wo_pad, :] * w_f32[kh, kw]
        out_row = jnp.maximum(acc, 0.0).astype(o_ref.dtype)
        o_ref[pl.ds(r, 1), :, :] = out_row[None]


def depthwise_conv_bn_relu_nhwc(x_nhwc, weight, gamma, beta, running_mean,
                                running_var, *, eps=1e-5, lane_block=128):
    """Depthwise Conv(valid, stride 1) + BN(inference) + ReLU, channels-last.

    x_nhwc : (N, H, W, C);  weight: (C, 1, K, K) (PyTorch depthwise layout).
    Returns (N, Ho, Wo, C) with Ho = H-K+1, Wo = W-K+1.
    """
    n, h, w, c = x_nhwc.shape
    k = weight.shape[-1]
    ho, wo = h - k + 1, w - k + 1
    out_dtype = x_nhwc.dtype

    # ---- fold BatchNorm (inference) into the weights and a single bias ----
    scale = gamma / jnp.sqrt(running_var + eps)                  # (C,)
    bias = beta - running_mean * scale                           # (C,)
    w_kkc = jnp.transpose(weight[:, 0, :, :], (1, 2, 0)) * scale[None, None, :]

    # ---- tiling: lanes = channels (padded to 128), sublanes = output W ----
    c_pad = pl.cdiv(c, lane_block) * lane_block
    n_c = c_pad // lane_block
    wo_pad = pl.cdiv(wo, 8) * 8                  # unmasked full-sublane stores
    w_in_pad = wo_pad + k - 1
    # TH output rows per grid step: big enough to hide per-step overhead,
    # capped so the output tile stays ~<=2 MiB.
    th = max(1, min(32, ho, (2 << 20) // (wo_pad * lane_block * 4)))
    n_h = pl.cdiv(ho, th)
    ho_pad = n_h * th
    h_in_pad = ho_pad + k - 1

    # Zero-pad (padded rows/cols/channels produce values that are sliced away).
    x_pad = jnp.pad(x_nhwc, ((0, 0), (0, h_in_pad - h),
                             (0, w_in_pad - w), (0, c_pad - c)))
    w_kkc = jnp.pad(w_kkc, ((0, 0), (0, 0), (0, c_pad - c))).astype(jnp.float32)
    bias2d = jnp.pad(bias, (0, c_pad - c)).reshape(1, c_pad).astype(jnp.float32)

    # Explicit scoped-VMEM budget (default is 16 MiB on v5e / 32 MiB on v7x,
    # which the double-buffered resident strip can exceed on real layers).
    in_bytes = 2 * h_in_pad * w_in_pad * lane_block * x_pad.dtype.itemsize
    out_bytes = 2 * th * wo_pad * lane_block * jnp.dtype(out_dtype).itemsize
    wgt_bytes = 2 * (k * k + 1) * lane_block * 4
    vmem_limit = int(min(max(in_bytes + out_bytes + wgt_bytes + (2 << 20),
                             32 << 20), 128 << 20))

    flops = 2 * k * k * n * ho * wo * c
    bytes_accessed = (x_pad.size * x_pad.dtype.itemsize
                      + w_kkc.size * 4 + bias2d.size * 4
                      + n * ho_pad * wo_pad * c_pad
                      * jnp.dtype(out_dtype).itemsize)

    kernel = functools.partial(_dwconv_bn_relu_kernel,
                               ksize=k, th=th, wo_pad=wo_pad)

    out_nhwc = pl.pallas_call(
        kernel,
        out_shape=jax.ShapeDtypeStruct((n, ho_pad, wo_pad, c_pad), out_dtype),
        grid_spec=pltpu.PrefetchScalarGridSpec(
            num_scalar_prefetch=0,
            grid=(n, n_c, n_h),          # h innermost: input strip stays resident
            in_specs=[
                # Full-height strip per (batch, channel-chunk); block index is
                # independent of hh, so Pallas fetches it once per (b, cc).
                pl.BlockSpec((None, h_in_pad, w_in_pad, lane_block),
                             lambda b, cc, hh: (b, 0, 0, cc)),
                pl.BlockSpec((k, k, lane_block), lambda b, cc, hh: (0, 0, cc)),
                pl.BlockSpec((1, lane_block), lambda b, cc, hh: (0, cc)),
            ],
            out_specs=pl.BlockSpec((None, th, wo_pad, lane_block),
                                   lambda b, cc, hh: (b, hh, 0, cc)),
        ),
        compiler_params=pltpu.CompilerParams(
            dimension_semantics=("parallel", "parallel", "arbitrary"),
            vmem_limit_bytes=vmem_limit),
        cost_estimate=pl.CostEstimate(flops=flops, transcendentals=0,
                                      bytes_accessed=bytes_accessed),
    )(x_pad, w_kkc, bias2d)

    # Strip row / col / channel padding.
    return out_nhwc[:, :ho, :wo, :c]


def depthwise_conv_bn_relu(x_nchw, weight, gamma, beta, running_mean,
                           running_var, *, eps=1e-5):
    """NCHW interface matching the PyTorch module.  (In a full network, keep
    activations NHWC and call depthwise_conv_bn_relu_nhwc to avoid the two
    extra full-tensor HBM layout passes these transposes imply.)"""
    x_nhwc = jnp.transpose(x_nchw, (0, 2, 3, 1))
    out_nhwc = depthwise_conv_bn_relu_nhwc(x_nhwc, weight, gamma, beta,
                                           running_mean, running_var, eps=eps)
    return jnp.transpose(out_nhwc, (0, 3, 1, 2))


if __name__ == "__main__":
    # Small deterministic example consistent with the module's forward.
    N, C, H, W = 2, 4, 16, 16
    K = 3  # kernel_size

    key = jax.random.PRNGKey(0)
    kx, kwt, kg, kb, km, kv = jax.random.split(key, 6)

    x = jax.random.normal(kx, (N, C, H, W), dtype=jnp.float32)
    weight = jax.random.normal(kwt, (C, 1, K, K), dtype=jnp.float32) * 0.1
    gamma = 1.0 + 0.1 * jax.random.normal(kg, (C,), dtype=jnp.float32)
    beta = 0.1 * jax.random.normal(kb, (C,), dtype=jnp.float32)
    running_mean = 0.1 * jax.random.normal(km, (C,), dtype=jnp.float32)
    running_var = 1.0 + 0.1 * jax.random.uniform(kv, (C,), dtype=jnp.float32)

    out = depthwise_conv_bn_relu(x, weight, gamma, beta, running_mean,
                                 running_var)
    jax.block_until_ready(out)

    # Pure-JAX reference: depthwise conv (valid, stride 1) -> BN -> ReLU.
    dn = jax.lax.conv_dimension_numbers(x.shape, weight.shape,
                                        ("NCHW", "OIHW", "NCHW"))
    ref = jax.lax.conv_general_dilated(x, weight, (1, 1), "VALID",
                                       dimension_numbers=dn,
                                       feature_group_count=C)
    ref_scale = gamma / jnp.sqrt(running_var + 1e-5)
    ref_bias = beta - running_mean * ref_scale
    ref = jnp.maximum(ref * ref_scale[None, :, None, None]
                      + ref_bias[None, :, None, None], 0.0)

    assert out.shape == (N, C, H - K + 1, W - K + 1), out.shape
    assert bool(jnp.all(out >= 0.0)), "ReLU output must be non-negative"
    assert bool(jnp.allclose(out, ref, atol=1e-4, rtol=1e-4)), \
        float(jnp.max(jnp.abs(out - ref)))
    print("KERNEL_OK")
</pallas_src>

<mosaic_0001>
module attributes {stable_mosaic.version = 11 : i64} {
  func.func @_dwconv_bn_relu_kernel(%arg0: i32, %arg1: i32, %arg2: i32, %arg3: memref<1x16x18x128xf32, #tpu.memory_space<vmem>>, %arg4: memref<3x3x128xf32, #tpu.memory_space<vmem>>, %arg5: memref<1x128xf32, #tpu.memory_space<vmem>>, %arg6: memref<1x14x16x128xf32, #tpu.memory_space<vmem>>) attributes {dimension_semantics = [#tpu.dimension_semantics<parallel>, #tpu.dimension_semantics<parallel>, #tpu.dimension_semantics<arbitrary>], iteration_bounds = array<i64: 2, 1, 1>, scalar_prefetch = 0 : i64, scratch_operands = 0 : i64, tpu.core_type = #tpu.core_type<tc>, window_params = [{transform_indices = @transform_0, window_bounds = array<i64: 1, 16, 18, 128>}, {transform_indices = @transform_1, window_bounds = array<i64: 3, 3, 128>}, {transform_indices = @transform_2, window_bounds = array<i64: 1, 128>}, {transform_indices = @transform_3, window_bounds = array<i64: 1, 14, 16, 128>}]} {
    %c14_i32 = arith.constant 14 : i32
    %0 = arith.muli %arg2, %c14_i32 : i32
    %c0 = arith.constant 0 : index
    %c0_0 = arith.constant 0 : index
    %c0_1 = arith.constant 0 : index
    %1 = vector.load %arg4[%c0, %c0_0, %c0_1] : memref<3x3x128xf32, #tpu.memory_space<vmem>>, vector<3x3x128xf32>
    %c0_2 = arith.constant 0 : index
    %c0_3 = arith.constant 0 : index
    %2 = vector.load %arg5[%c0_2, %c0_3] : memref<1x128xf32, #tpu.memory_space<vmem>>, vector<1x128xf32>
    %3 = vector.shape_cast %2 : vector<1x128xf32> to vector<1x128xf32>
    %4 = vector.broadcast %3 : vector<1x128xf32> to vector<16x128xf32>
    %c0_i32 = arith.constant 0 : i32
    %c14_i32_4 = arith.constant 14 : i32
    %5 = arith.addi %c0_i32, %c14_i32_4 : i32
    %c1_i32 = arith.constant 1 : i32
    scf.for %arg7 = %c0_i32 to %5 step %c1_i32  : i32 {
      %c1_i32_6 = arith.constant 1 : i32
      %6 = arith.muli %arg7, %c1_i32_6 : i32
      %c0_i32_7 = arith.constant 0 : i32
      %7 = arith.addi %c0_i32_7, %6 : i32
      %8 = arith.addi %0, %7 : i32
      %c0_i32_8 = arith.constant 0 : i32
      %9 = arith.addi %8, %c0_i32_8 : i32
      %c0_9 = arith.constant 0 : index
      %10 = arith.index_cast %9 : i32 to index
      %c0_10 = arith.constant 0 : index
      %c0_11 = arith.constant 0 : index
      %11 = vector.load %arg3[%c0_9, %10, %c0_10, %c0_11] : memref<1x16x18x128xf32, #tpu.memory_space<vmem>>, vector<1x1x18x128xf32>
      %12 = vector.shape_cast %11 : vector<1x1x18x128xf32> to vector<18x128xf32>
      %13 = vector.extract_strided_slice %12 {offsets = [0, 0], sizes = [16, 128], strides = [1, 1]} : vector<18x128xf32> to vector<16x128xf32>
      %14 = vector.extract_strided_slice %1 {offsets = [0, 0, 0], sizes = [1, 1, 128], strides = [1, 1, 1]} : vector<3x3x128xf32> to vector<1x1x128xf32>
      %15 = vector.shape_cast %14 : vector<1x1x128xf32> to vector<128xf32>
      %16 = vector.shape_cast %15 : vector<128xf32> to vector<1x128xf32>
      %17 = vector.broadcast %16 : vector<1x128xf32> to vector<16x128xf32>
      %18 = arith.mulf %13, %17 : vector<16x128xf32>
      %19 = arith.addf %4, %18 : vector<16x128xf32>
      %20 = vector.extract_strided_slice %12 {offsets = [1, 0], sizes = [16, 128], strides = [1, 1]} : vector<18x128xf32> to vector<16x128xf32>
      %21 = vector.extract_strided_slice %1 {offsets = [0, 1, 0], sizes = [1, 1, 128], strides = [1, 1, 1]} : vector<3x3x128xf32> to vector<1x1x128xf32>
      %22 = vector.shape_cast %21 : vector<1x1x128xf32> to vector<128xf32>
      %23 = vector.shape_cast %22 : vector<128xf32> to vector<1x128xf32>
      %24 = vector.broadcast %23 : vector<1x128xf32> to vector<16x128xf32>
      %25 = arith.mulf %20, %24 : vector<16x128xf32>
      %26 = arith.addf %19, %25 : vector<16x128xf32>
      %27 = vector.extract_strided_slice %12 {offsets = [2, 0], sizes = [16, 128], strides = [1, 1]} : vector<18x128xf32> to vector<16x128xf32>
      %28 = vector.extract_strided_slice %1 {offsets = [0, 2, 0], sizes = [1, 1, 128], strides = [1, 1, 1]} : vector<3x3x128xf32> to vector<1x1x128xf32>
      %29 = vector.shape_cast %28 : vector<1x1x128xf32> to vector<128xf32>
      %30 = vector.shape_cast %29 : vector<128xf32> to vector<1x128xf32>
      %31 = vector.broadcast %30 : vector<1x128xf32> to vector<16x128xf32>
      %32 = arith.mulf %27, %31 : vector<16x128xf32>
      %33 = arith.addf %26, %32 : vector<16x128xf32>
      %34 = arith.addi %0, %7 : i32
      %c1_i32_12 = arith.constant 1 : i32
      %35 = arith.addi %34, %c1_i32_12 : i32
      %c0_13 = arith.constant 0 : index
      %36 = arith.index_cast %35 : i32 to index
      %c0_14 = arith.constant 0 : index
      %c0_15 = arith.constant 0 : index
      %37 = vector.load %arg3[%c0_13, %36, %c0_14, %c0_15] : memref<1x16x18x128xf32, #tpu.memory_space<vmem>>, vector<1x1x18x128xf32>
      %38 = vector.shape_cast %37 : vector<1x1x18x128xf32> to vector<18x128xf32>
      %39 = vector.extract_strided_slice %38 {offsets = [0, 0], sizes = [16, 128], strides = [1, 1]} : vector<18x128xf32> to vector<16x128xf32>
      %40 = vector.extract_strided_slice %1 {offsets = [1, 0, 0], sizes = [1, 1, 128], strides = [1, 1, 1]} : vector<3x3x128xf32> to vector<1x1x128xf32>
      %41 = vector.shape_cast %40 : vector<1x1x128xf32> to vector<128xf32>
      %42 = vector.shape_cast %41 : vector<128xf32> to vector<1x128xf32>
      %43 = vector.broadcast %42 : vector<1x128xf32> to vector<16x128xf32>
      %44 = arith.mulf %39, %43 : vector<16x128xf32>
      %45 = arith.addf %33, %44 : vector<16x128xf32>
      %46 = vector.extract_strided_slice %38 {offsets = [1, 0], sizes = [16, 128], strides = [1, 1]} : vector<18x128xf32> to vector<16x128xf32>
      %47 = vector.extract_strided_slice %1 {offsets = [1, 1, 0], sizes = [1, 1, 128], strides = [1, 1, 1]} : vector<3x3x128xf32> to vector<1x1x128xf32>
      %48 = vector.shape_cast %47 : vector<1x1x128xf32> to vector<128xf32>
      %49 = vector.shape_cast %48 : vector<128xf32> to vector<1x128xf32>
      %50 = vector.broadcast %49 : vector<1x128xf32> to vector<16x128xf32>
      %51 = arith.mulf %46, %50 : vector<16x128xf32>
      %52 = arith.addf %45, %51 : vector<16x128xf32>
      %53 = vector.extract_strided_slice %38 {offsets = [2, 0], sizes = [16, 128], strides = [1, 1]} : vector<18x128xf32> to vector<16x128xf32>
      %54 = vector.extract_strided_slice %1 {offsets = [1, 2, 0], sizes = [1, 1, 128], strides = [1, 1, 1]} : vector<3x3x128xf32> to vector<1x1x128xf32>
      %55 = vector.shape_cast %54 : vector<1x1x128xf32> to vector<128xf32>
      %56 = vector.shape_cast %55 : vector<128xf32> to vector<1x128xf32>
      %57 = vector.broadcast %56 : vector<1x128xf32> to vector<16x128xf32>
      %58 = arith.mulf %53, %57 : vector<16x128xf32>
      %59 = arith.addf %52, %58 : vector<16x128xf32>
      %60 = arith.addi %0, %7 : i32
      %c2_i32 = arith.constant 2 : i32
      %61 = arith.addi %60, %c2_i32 : i32
      %c0_16 = arith.constant 0 : index
      %62 = arith.index_cast %61 : i32 to index
      %c0_17 = arith.constant 0 : index
      %c0_18 = arith.constant 0 : index
      %63 = vector.load %arg3[%c0_16, %62, %c0_17, %c0_18] : memref<1x16x18x128xf32, #tpu.memory_space<vmem>>, vector<1x1x18x128xf32>
      %64 = vector.shape_cast %63 : vector<1x1x18x128xf32> to vector<18x128xf32>
      %65 = vector.extract_strided_slice %64 {offsets = [0, 0], sizes = [16, 128], strides = [1, 1]} : vector<18x128xf32> to vector<16x128xf32>
      %66 = vector.extract_strided_slice %1 {offsets = [2, 0, 0], sizes = [1, 1, 128], strides = [1, 1, 1]} : vector<3x3x128xf32> to vector<1x1x128xf32>
      %67 = vector.shape_cast %66 : vector<1x1x128xf32> to vector<128xf32>
      %68 = vector.shape_cast %67 : vector<128xf32> to vector<1x128xf32>
      %69 = vector.broadcast %68 : vector<1x128xf32> to vector<16x128xf32>
      %70 = arith.mulf %65, %69 : vector<16x128xf32>
      %71 = arith.addf %59, %70 : vector<16x128xf32>
      %72 = vector.extract_strided_slice %64 {offsets = [1, 0], sizes = [16, 128], strides = [1, 1]} : vector<18x128xf32> to vector<16x128xf32>
      %73 = vector.extract_strided_slice %1 {offsets = [2, 1, 0], sizes = [1, 1, 128], strides = [1, 1, 1]} : vector<3x3x128xf32> to vector<1x1x128xf32>
      %74 = vector.shape_cast %73 : vector<1x1x128xf32> to vector<128xf32>
      %75 = vector.shape_cast %74 : vector<128xf32> to vector<1x128xf32>
      %76 = vector.broadcast %75 : vector<1x128xf32> to vector<16x128xf32>
      %77 = arith.mulf %72, %76 : vector<16x128xf32>
      %78 = arith.addf %71, %77 : vector<16x128xf32>
      %79 = vector.extract_strided_slice %64 {offsets = [2, 0], sizes = [16, 128], strides = [1, 1]} : vector<18x128xf32> to vector<16x128xf32>
      %80 = vector.extract_strided_slice %1 {offsets = [2, 2, 0], sizes = [1, 1, 128], strides = [1, 1, 1]} : vector<3x3x128xf32> to vector<1x1x128xf32>
      %81 = vector.shape_cast %80 : vector<1x1x128xf32> to vector<128xf32>
      %82 = vector.shape_cast %81 : vector<128xf32> to vector<1x128xf32>
      %83 = vector.broadcast %82 : vector<1x128xf32> to vector<16x128xf32>
      %84 = arith.mulf %79, %83 : vector<16x128xf32>
      %85 = arith.addf %78, %84 : vector<16x128xf32>
      %cst = arith.constant 0.000000e+00 : f32
      %86 = vector.broadcast %cst : f32 to vector<16x128xf32>
      %87 = arith.maximumf %85, %86 : vector<16x128xf32>
      %88 = vector.shape_cast %87 : vector<16x128xf32> to vector<1x16x128xf32>
      %c0_19 = arith.constant 0 : index
      %89 = arith.index_cast %7 : i32 to index
      %c0_20 = arith.constant 0 : index
      %c0_21 = arith.constant 0 : index
      %90 = vector.load %arg6[%c0_19, %89, %c0_20, %c0_21] : memref<1x14x16x128xf32, #tpu.memory_space<vmem>>, vector<1x1x16x128xf32>
      %91 = vector.shape_cast %90 : vector<1x1x16x128xf32> to vector<1x16x128xf32>
      %92 = vector.shape_cast %88 : vector<1x16x128xf32> to vector<1x1x16x128xf32>
      tpu.vector_store %arg6[%c0_19, %89, %c0_20, %c0_21], %92 {strides = array<i32>} : memref<1x14x16x128xf32, #tpu.memory_space<vmem>>, vector<1x1x16x128xf32>,
    }
    %c14_i32_5 = arith.constant 14 : i32
    return
  }
  func.func @transform_0(%arg0: i32, %arg1: i32, %arg2: i32) -> (i32, i32, i32, i32) {
    %c0_i32 = arith.constant 0 : i32
    %c0_i32_0 = arith.constant 0 : i32
    %c0_i32_1 = arith.constant 0 : i32
    return %arg0, %c0_i32, %c0_i32_0, %arg1 : i32, i32, i32, i32
  }
  func.func @transform_1(%arg0: i32, %arg1: i32, %arg2: i32) -> (i32, i32, i32) {
    %c0_i32 = arith.constant 0 : i32
    %c0_i32_0 = arith.constant 0 : i32
    %c0_i32_1 = arith.constant 0 : i32
    return %c0_i32, %c0_i32_0, %arg1 : i32, i32, i32
  }
  func.func @transform_2(%arg0: i32, %arg1: i32, %arg2: i32) -> (i32, i32) {
    %c0_i32 = arith.constant 0 : i32
    %c0_i32_0 = arith.constant 0 : i32
    return %c0_i32, %arg1 : i32, i32
  }
  func.func @transform_3(%arg0: i32, %arg1: i32, %arg2: i32) -> (i32, i32, i32, i32) {
    %c0_i32 = arith.constant 0 : i32
    %c0_i32_0 = arith.constant 0 : i32
    return %arg0, %arg2, %c0_i32, %arg1 : i32, i32, i32, i32
  }
}

</mosaic_0001>

<llo_original>
// kernel: tpu_custom_call.1
$region0: #{tpu_custom_call.1}
  #allocation0 [shape = 'u32[]', space=smem, size = 0x4, offset = 0x4, fixed_abs, tag = 'smem constant byte address 0x4 - core index']
  #allocation1 [shape = 'u32[144,128]{1,0:T(1,128)}', space=vmem, size = 0x12000, scoped, tag = 'internal scratch']
  %s0 = inlined_call_operand.vmem [shape: f32[2,16,18,128], index: 0, kind: input, shape index: {}]
  %s1 = inlined_call_operand.vmem [shape: f32[3,3,128], index: 1, kind: input, shape index: {}]
  %s2 = inlined_call_operand.vmem [shape: f32[1,128], index: 2, kind: input, shape index: {}]
  %s3 = inlined_call_operand.hbm [shape: f32[2,14,16,128], index: 3, kind: output, shape index: {}]
  %s4 = sld [smem:[#allocation0]]
  $region52: #{tpu_custom_call.1} parent=0
    _
  %s6 = ssub.s32 1, %s4
  %s7 = scalar_select 0, %s6, %s4
  $region1: #{tpu_custom_call.1} parent=0
    #allocation2 [shape = 'u8[229376]{0}', space=vmem, size = 0x38000, scoped, tag = 'output window, operand 0']
    #allocation3 [shape = 's32[2]{0}', space=sflag, size = 0x8, scoped, tag = 'scoped memory for tpu_custom_call.1']
    %8 = vsyncpa [#allocation3], 0
    %s9 = scalar_lea.sflag [#allocation3], 1
    %10 = vsyncpa %s9, 0
    loop: start=0, step=1, limit=4
    $region2: #{tpu_custom_call.1} parent=1 // loop_pre_header
      _
    $region3: #{tpu_custom_call.1} parent=1 // loop_header
      %s12 = sphi 0, %s16
      %p13 = scmp.ge.s32.totalorder %s12, 4
      %s19 = sphi 0, %s38
      %s20 = sphi 0, %s34
      %s21 = sphi 0, %s30
      %s22 = sphi 0, %s19
      %s23 = sphi 0, %s20
      %s24 = sphi 0, %s21
      %s25 = sphi 0, %s22
      %s26 = sphi 0, %s23
      %s27 = sphi 0, %s24
      %s43 = sphi 0, %s45
      %s46 = sphi 0, %s43
      %s47 = sphi 0, %s46
      %s63 = sphi 0, %s47
      %s69 = sphi 0, %s71
      %s72 = sphi 0, %s69
      %s73 = sphi 0, %s72
      %s89 = sphi 0, %s73
      %s95 = sphi 0, %s97
      %s98 = sphi 0, %s95
      %s99 = sphi 0, %s98
      %s115 = sphi 0, %s99
      %s125 = sphi 0, %s127
      %s128 = sphi 0, %s125
      %s129 = sphi 0, %s128
      %s145 = sphi 0, %s129
    $region4: #{tpu_custom_call.1} parent=1 // loop_header_branch
      %15 = sbr.rel (%p13) target = $region8
    $region5: #{tpu_custom_call.1} parent=1 // loop_body
      %s17 = ssub.s32 %s12, 1
      %s18 = ssub.s32 %s12, 2
      %s28 = sadd.s32 1, %s21
      %p29 = scmp.ge.s32.totalorder %s28, 1
      %s30 = scalar_select %p29, 0, %s28
      %s31 = sadd.s32 1, %s20
      %s32 = scalar_select %p29, %s31, %s20
      %p33 = scmp.ge.s32.totalorder %s32, 1
      %s34 = scalar_select %p33, 0, %s32
      %s35 = sadd.s32 1, %s19
      %s36 = scalar_select %p33, %s35, %s19
      %p37 = scmp.ge.s32.totalorder %s36, 2
      %s38 = scalar_select %p37, 0, %s36
      %s39 = ssub.s32 %s19, %s38
      %s40 = ssub.s32 %s20, %s34
      %s41 = sor.u32 %s39, %s40
      %p42 = scmp.eq.s32.totalorder %s41, 0
      %s44 = sadd.s32 %s43, 1
      %s45 = scalar_select %p42, %s43, %s44
      %p48 = pneg %p42
      %p49 = scmp.eq.s32.totalorder %s12, 1
      %p50 = por %p48, %p49
      %p51 = scmp.ne.s32.totalorder %s43, %s46
      %p52 = scmp.eq.s32.totalorder %s12, 0
      %p53 = por %p51, %p52
      %p54 = scmp.ne.s32.totalorder %s43, %s46
      %p55 = scmp.eq.s32.totalorder %s17, 1
      %p56 = por %p54, %p55
      %p57 = scmp.ne.s32.totalorder %s46, %s47
      %p58 = scmp.eq.s32.totalorder %s17, 0
      %p59 = por %p57, %p58
      %p60 = scmp.ne.s32.totalorder %s46, %s47
      %p61 = scmp.eq.s32.totalorder %s18, 1
      %p62 = por %p60, %p61
      %p64 = scmp.ne.s32.totalorder %s47, %s63
      %p65 = scmp.eq.s32.totalorder %s18, 0
      %p66 = por %p64, %p65
      %s67 = ssub.s32 %s20, %s34
      %p68 = scmp.eq.s32.totalorder %s67, 0
      %s70 = sadd.s32 %s69, 1
      %s71 = scalar_select %p68, %s69, %s70
      %p74 = pneg %p68
      %p75 = scmp.eq.s32.totalorder %s12, 1
      %p76 = por %p74, %p75
      %p77 = scmp.ne.s32.totalorder %s69, %s72
      %p78 = scmp.eq.s32.totalorder %s12, 0
      %p79 = por %p77, %p78
      %p80 = scmp.ne.s32.totalorder %s69, %s72
      %p81 = scmp.eq.s32.totalorder %s17, 1
      %p82 = por %p80, %p81
      %p83 = scmp.ne.s32.totalorder %s72, %s73
      %p84 = scmp.eq.s32.totalorder %s17, 0
      %p85 = por %p83, %p84
      %p86 = scmp.ne.s32.totalorder %s72, %s73
      %p87 = scmp.eq.s32.totalorder %s18, 1
      %p88 = por %p86, %p87
      %p90 = scmp.ne.s32.totalorder %s73, %s89
      %p91 = scmp.eq.s32.totalorder %s18, 0
      %p92 = por %p90, %p91
      %s93 = ssub.s32 %s20, %s34
      %p94 = scmp.eq.s32.totalorder %s93, 0
      %s96 = sadd.s32 %s95, 1
      %s97 = scalar_select %p94, %s95, %s96
      %p100 = pneg %p94
      %p101 = scmp.eq.s32.totalorder %s12, 1
      %p102 = por %p100, %p101
      %p103 = scmp.ne.s32.totalorder %s95, %s98
      %p104 = scmp.eq.s32.totalorder %s12, 0
      %p105 = por %p103, %p104
      %p106 = scmp.ne.s32.totalorder %s95, %s98
      %p107 = scmp.eq.s32.totalorder %s17, 1
      %p108 = por %p106, %p107
      %p109 = scmp.ne.s32.totalorder %s98, %s99
      %p110 = scmp.eq.s32.totalorder %s17, 0
      %p111 = por %p109, %p110
      %p112 = scmp.ne.s32.totalorder %s98, %s99
      %p113 = scmp.eq.s32.totalorder %s18, 1
      %p114 = por %p112, %p113
      %p116 = scmp.ne.s32.totalorder %s99, %s115
      %p117 = scmp.eq.s32.totalorder %s18, 0
      %p118 = por %p116, %p117
      %s119 = ssub.s32 %s19, %s38
      %s120 = ssub.s32 %s21, %s30
      %s121 = sor.u32 %s119, %s120
      %s122 = ssub.s32 %s20, %s34
      %s123 = sor.u32 %s121, %s122
      %p124 = scmp.eq.s32.totalorder %s123, 0
      %s126 = sadd.s32 %s125, 1
      %s127 = scalar_select %p124, %s125, %s126
      %p130 = pneg %p124
      %p131 = scmp.eq.s32.totalorder %s12, 1
      %p132 = por %p130, %p131
      %p133 = scmp.ne.s32.totalorder %s125, %s128
      %p134 = scmp.eq.s32.totalorder %s12, 0
      %p135 = por %p133, %p134
      %p136 = scmp.ne.s32.totalorder %s125, %s128
      %p137 = scmp.eq.s32.totalorder %s17, 1
      %p138 = por %p136, %p137
      %p139 = scmp.ne.s32.totalorder %s128, %s129
      %p140 = scmp.eq.s32.totalorder %s17, 0
      %p141 = por %p139, %p140
      %p142 = scmp.ne.s32.totalorder %s128, %s129
      %p143 = scmp.eq.s32.totalorder %s18, 1
      %p144 = por %p142, %p143
      %p146 = scmp.ne.s32.totalorder %s129, %s145
      %p147 = scmp.eq.s32.totalorder %s18, 0
      %p148 = por %p146, %p147
      %p149 = scmp.le.s32.totalorder 1, %s12
      %p150 = scmp.lt.s32.totalorder %s12, 3
      %p151 = pnand %p149, %p150
      %p152 = pneg %p151
      // Predicated region
      $region9: #{tpu_custom_call.1} parent=5 // pred_check
        _
      $region10: #{tpu_custom_call.1} parent=5 // pred_check_branch
        %154 = sbr.rel (%p151) target = $region12
      $region11: #{tpu_custom_call.1} parent=5 // pred_region
        %s155 = ssub.s32 %s12, 1
        // Predicated region
        $region13: #{tpu_custom_call.1} parent=11 // pred_check
          %p156 = pneg %p85
        $region14: #{tpu_custom_call.1} parent=11 // pred_check_branch
          %158 = sbr.rel (%p156) target = $region16
        $region15: #{tpu_custom_call.1} parent=11 // pred_region
          %p159 = scmp.lt.s32.totalorder %s23, 0
          %s160 = scalar_select %p159, %s23, 0
          %s161 = smul.addr %s160, 4
          %s162 = scalar_lea.vmem %s1, %s161
        $region16: #{tpu_custom_call.1} parent=11 // pred_fallthru
          _
        // Predicated region
        $region17: #{tpu_custom_call.1} parent=11 // pred_check
          %p163 = pneg %p111
        $region18: #{tpu_custom_call.1} parent=11 // pred_check_branch
          %165 = sbr.rel (%p163) target = $region20
        $region19: #{tpu_custom_call.1} parent=11 // pred_region
          %p166 = scmp.lt.s32.totalorder %s23, 0
          %s167 = scalar_select %p166, %s23, 0
          %s168 = scalar_lea.vmem %s2, %s167
        $region20: #{tpu_custom_call.1} parent=11 // pred_fallthru
          _
      $region12: #{tpu_custom_call.1} parent=5 // pred_fallthru
        _
      %p169 = scmp.lt.s32.totalorder %s12, 2
      // Predicated region
      $region21: #{tpu_custom_call.1} parent=5 // pred_check
        %p170 = pneg %p169
      $region22: #{tpu_custom_call.1} parent=5 // pred_check_branch
        %172 = sbr.rel (%p170) target = $region24
      $region23: #{tpu_custom_call.1} parent=5 // pred_region
        // Predicated region
        $region25: #{tpu_custom_call.1} parent=23 // pred_check
          %p173 = pneg %p53
        $region26: #{tpu_custom_call.1} parent=23 // pred_check_branch
          %175 = sbr.rel (%p173) target = $region28
        $region27: #{tpu_custom_call.1} parent=23 // pred_region
          %p176 = scmp.lt.s32.totalorder %s19, 1
          %s177 = scalar_select %p176, %s19, 1
          %p178 = scmp.lt.s32.totalorder %s20, 0
          %s179 = scalar_select %p178, %s20, 0
          %s180 = smul.addr %s177, 48
          %s181 = sadd.s32 %s179, %s180
          %s182 = smul.addr %s181, 8
          %s183 = scalar_lea.vmem %s0, %s182
        $region28: #{tpu_custom_call.1} parent=23 // pred_fallthru
          _
      $region24: #{tpu_custom_call.1} parent=5 // pred_fallthru
        _
      %p184 = scmp.le.s32.totalorder 1, %s12
      %p185 = scmp.lt.s32.totalorder %s12, 3
      %p186 = pnand %p184, %p185
      %p187 = pneg %p186
      // Predicated region
      $region29: #{tpu_custom_call.1} parent=5 // pred_check
        _
      $region30: #{tpu_custom_call.1} parent=5 // pred_check_branch
        %189 = sbr.rel (%p186) target = $region32
      $region31: #{tpu_custom_call.1} parent=5 // pred_region
        %s190 = ssub.s32 %s12, 1
        %p191 = scmp.lt.s32.totalorder %s22, 1
        %s192 = scalar_select %p191, %s22, 1
        %p193 = scmp.lt.s32.totalorder %s23, 0
        %s194 = scalar_select %p193, %s23, 0
        %s195 = smul.addr %s192, 48
        %s196 = sadd.s32 %s194, %s195
        %s197 = smul.addr %s196, 8
        %s198 = scalar_lea.vmem %s0, %s197
        %p199 = pneg %p59
        %p200 = pneg %p56
        %p201 = scmp.lt.s32.totalorder %s23, 0
        %s202 = scalar_select %p201, %s23, 0
        %s203 = smul.addr %s202, 4
        %s204 = scalar_lea.vmem %s1, %s203
        %p205 = pneg %p85
        %p206 = pneg %p82
        %p207 = scmp.lt.s32.totalorder %s23, 0
        %s208 = scalar_select %p207, %s23, 0
        %s209 = scalar_lea.vmem %s2, %s208
        %p210 = pneg %p111
        %p211 = pneg %p108
        %p212 = pneg %p141
        %p213 = pneg %p138
        %s214 = sand.u32 %s128, 1
        %s215 = scalar_lea.sflag [#allocation3], %s214
        %s216 = sand.u32 %s128, 1
        %s217 = smul.addr %s216, 224
        %s218 = scalar_lea.vmem [#allocation2], %s217
        %p219 = scmp.lt.s32.totalorder %s22, 1
        %s220 = scalar_select %p219, %s22, 1
        %p221 = scmp.lt.s32.totalorder %s23, 0
        %s222 = scalar_select %p221, %s23, 0
        %s223 = smul.addr %s220, 48
        %s224 = sadd.s32 %s222, %s223
        %s225 = smul.addr %s224, 8
        %s226 = scalar_lea.vmem %s0, %s225
        %p227 = scmp.lt.s32.totalorder %s23, 0
        %s228 = scalar_select %p227, %s23, 0
        %s229 = smul.addr %s228, 4
        %s230 = scalar_lea.vmem %s1, %s229
        %p231 = scmp.lt.s32.totalorder %s23, 0
        %s232 = scalar_select %p231, %s23, 0
        %s233 = scalar_lea.vmem %s2, %s232
        %s234 = smul.u32 14, %s24
        %s235 = smul.u32 %s24, 14
        %v236 = vld [vmem:[%s230] sm:$0x7]
        %v237 = vld [vmem:[%s230 + $0x4] sm:$0x7]
        %v238 = vld [vmem:[%s230 + $0x8] sm:$0x7]
        %v239 = vld [vmem:[%s233] sm:$0x1]
        %v241 = vlaneseq
        %v242 = vshrl.u32 %v241, 7
        %v243 = vsub.s32 0, %v242
        %v244 = vrot.slane %v239, %v243
        loop: start=0, step=1, limit=14
        $region33: #{tpu_custom_call.1} parent=31 // loop_pre_header
          _
        $region34: #{tpu_custom_call.1} parent=31 // loop_header
          %s247 = sphi 0, %s251
          %p248 = scmp.ge.s32.totalorder %s247, 14
        $region35: #{tpu_custom_call.1} parent=31 // loop_header_branch
          %250 = sbr.rel (%p248) target = $region39
        $region36: #{tpu_custom_call.1} parent=31 // loop_body
          %s252 = sadd.s32 %s235, %s247
          %s253 = smul.u32 %s252, 24
          %s254 = scalar_lea.vmem %s226, %s253
          %v255 = vld [vmem:[%s254] sm:$0xff]
          %v256 = vld [vmem:[%s254 + $0x8] sm:$0xff]
          %v257 = vld [vmem:[%s254 + $0x10] sm:$0x3]
          %v258 = vlaneseq
          %v259 = vshrl.u32 %v258, 7
          %v260 = vsub.s32 0, %v259
          %v261 = vrot.slane %v236, %v260
          %v262 = vmul.f32 %v255, %v261
          %v263 = vmul.f32 %v256, %v261
          %v264 = vadd.f32 %v244, %v262
          %v265 = vadd.f32 %v244, %v263
          %v266 = vlaneseq
          %v267 = vshrl.u32 %v266, 7
          %v268 = vsub.s32 1, %v267
          %v269 = vrot.slane %v236, %v268
          %v270 = vmul.f32 %v255, %v269
          %v271 = vmul.f32 %v256, %v269
          %v272 = vmul.f32 %v257, %v269
          %vm276 = vcmask 1046528
          %v277 = vrot.slane %v270, 1
          %v278 = vrot.slane %v271, 1
          %v279 = vsel %vm276, %v277, %v278
          %v280 = vrot.slane %v272, 1
          %v281 = vsel %vm276, %v278, %v280
          %v284 = vadd.f32 %v264, %v279
          %v285 = vadd.f32 %v265, %v281
          %v286 = vlaneseq
          %v287 = vshrl.u32 %v286, 7
          %v288 = vsub.s32 2, %v287
          %v289 = vrot.slane %v236, %v288
          %v290 = vmul.f32 %v255, %v289
          %v291 = vmul.f32 %v256, %v289
          %v292 = vmul.f32 %v257, %v289
          %vm296 = vcmask 1045504
          %v297 = vrot.slane %v290, 2
          %v298 = vrot.slane %v291, 2
          %v299 = vsel %vm296, %v297, %v298
          %v300 = vrot.slane %v292, 2
          %v301 = vsel %vm296, %v298, %v300
          %v304 = vadd.f32 %v284, %v299
          %v305 = vadd.f32 %v285, %v301
          %s306 = sadd.s32 %s252, 1
          %s307 = smul.u32 %s306, 24
          %s308 = scalar_lea.vmem %s226, %s307
          %v309 = vld [vmem:[%s308] sm:$0xff]
          %v310 = vld [vmem:[%s308 + $0x8] sm:$0xff]
          %v311 = vld [vmem:[%s308 + $0x10] sm:$0x3]
          %v312 = vlaneseq
          %v313 = vshrl.u32 %v312, 7
          %v314 = vsub.s32 0, %v313
          %v315 = vrot.slane %v237, %v314
          %v316 = vmul.f32 %v309, %v315
          %v317 = vmul.f32 %v310, %v315
          %v318 = vadd.f32 %v304, %v316
          %v319 = vadd.f32 %v305, %v317
          %v320 = vlaneseq
          %v321 = vshrl.u32 %v320, 7
          %v322 = vsub.s32 1, %v321
          %v323 = vrot.slane %v237, %v322
          %v324 = vmul.f32 %v309, %v323
          %v325 = vmul.f32 %v310, %v323
          %v326 = vmul.f32 %v311, %v323
          %v330 = vrot.slane %v324, 1
          %v331 = vrot.slane %v325, 1
          %v332 = vsel %vm276, %v330, %v331
          %v333 = vrot.slane %v326, 1
          %v334 = vsel %vm276, %v331, %v333
          %v337 = vadd.f32 %v318, %v332
          %v338 = vadd.f32 %v319, %v334
          %v339 = vlaneseq
          %v340 = vshrl.u32 %v339, 7
          %v341 = vsub.s32 2, %v340
          %v342 = vrot.slane %v237, %v341
          %v343 = vmul.f32 %v309, %v342
          %v344 = vmul.f32 %v310, %v342
          %v345 = vmul.f32 %v311, %v342
          %v349 = vrot.slane %v343, 2
          %v350 = vrot.slane %v344, 2
          %v351 = vsel %vm296, %v349, %v350
          %v352 = vrot.slane %v345, 2
          %v353 = vsel %vm296, %v350, %v352
          %v356 = vadd.f32 %v337, %v351
          %v357 = vadd.f32 %v338, %v353
          %s358 = sadd.s32 %s252, 2
          %s359 = smul.u32 %s358, 24
          %s360 = scalar_lea.vmem %s226, %s359
          %v361 = vld [vmem:[%s360] sm:$0xff]
          %v362 = vld [vmem:[%s360 + $0x8] sm:$0xff]
          %v363 = vld [vmem:[%s360 + $0x10] sm:$0x3]
          %v364 = vlaneseq
          %v365 = vshrl.u32 %v364, 7
          %v366 = vsub.s32 0, %v365
          %v367 = vrot.slane %v238, %v366
          %v368 = vmul.f32 %v361, %v367
          %v369 = vmul.f32 %v362, %v367
          %v370 = vadd.f32 %v356, %v368
          %v371 = vadd.f32 %v357, %v369
          %v372 = vlaneseq
          %v373 = vshrl.u32 %v372, 7
          %v374 = vsub.s32 1, %v373
          %v375 = vrot.slane %v238, %v374
          %v376 = vmul.f32 %v361, %v375
          %v377 = vmul.f32 %v362, %v375
          %v378 = vmul.f32 %v363, %v375
          %v382 = vrot.slane %v376, 1
          %v383 = vrot.slane %v377, 1
          %v384 = vsel %vm276, %v382, %v383
          %v385 = vrot.slane %v378, 1
          %v386 = vsel %vm276, %v383, %v385
          %v389 = vadd.f32 %v370, %v384
          %v390 = vadd.f32 %v371, %v386
          %v391 = vlaneseq
          %v392 = vshrl.u32 %v391, 7
          %v393 = vsub.s32 2, %v392
          %v394 = vrot.slane %v238, %v393
          %v395 = vmul.f32 %v361, %v394
          %v396 = vmul.f32 %v362, %v394
          %v397 = vmul.f32 %v363, %v394
          %v401 = vrot.slane %v395, 2
          %v402 = vrot.slane %v396, 2
          %v403 = vsel %vm296, %v401, %v402
          %v404 = vrot.slane %v397, 2
          %v405 = vsel %vm296, %v402, %v404
          %v408 = vadd.f32 %v389, %v403
          %v409 = vadd.f32 %v390, %v405
          %v410 = vmax.f32 %v408, 0.0
          %v411 = vmax.f32 %v409, 0.0
          %s412 = smul.u32 %s247, 16
          %s413 = scalar_lea.vmem %s218, %s412 [#allocation2]
          %414 = vst [vmem:[%s413] sm:$0xff] %v410
          %415 = vst [vmem:[%s413 + $0x8] sm:$0xff] %v411
        $region37: #{tpu_custom_call.1} parent=31 // loop_footer
          %s251 = sadd.s32 1, %s247
        $region38: #{tpu_custom_call.1} parent=31 // loop_footer_branch
          %246 = sbr.rel target = $region34
        $region39: #{tpu_custom_call.1} parent=31 // loop_exit
          _
        %s416 = sand.u32 %s128, 1
        %s417 = scalar_lea.sflag [#allocation3], %s416
        %s418 = sand.u32 %s128, 1
        %s419 = smul.addr %s418, 224
        %s420 = scalar_lea.vmem [#allocation2], %s419
        // Predicated region
        $region40: #{tpu_custom_call.1} parent=31 // pred_check
          %p421 = pneg %p138
        $region41: #{tpu_custom_call.1} parent=31 // pred_check_branch
          %423 = sbr.rel (%p421) target = $region43
        $region42: #{tpu_custom_call.1} parent=31 // pred_region
          %s424 = smul.u32 14, %s24
          %s426 = ssub.s32 3584, 3584
          %427 = vsyncadd %s417, %s426
          %s428 = smul.addr %s424, 2
          %s429 = sadd.s32 %s23, %s428
          %s430 = smul.addr %s22, 28
          %s431 = sadd.s32 %s429, %s430
          %s432 = smul.addr %s431, 128
          %s433 = scalar_lea.hbm %s3, %s432
          %s434 = sshll.u32 %s420, 4
          %s435 = int_to_ptr.vmem [resolvable:$true] %s434
          %440 = dma.vmem_to_hbm [thread:$0]  %s435, 3584, %s433, %s417, 128, 128, 8
        $region43: #{tpu_custom_call.1} parent=31 // pred_fallthru
          _
      $region32: #{tpu_custom_call.1} parent=5 // pred_fallthru
        _
      %p441 = scmp.le.s32.totalorder 2, %s12
      // Predicated region
      $region44: #{tpu_custom_call.1} parent=5 // pred_check
        %p442 = pneg %p441
      $region45: #{tpu_custom_call.1} parent=5 // pred_check_branch
        %444 = sbr.rel (%p442) target = $region47
      $region46: #{tpu_custom_call.1} parent=5 // pred_region
        %s445 = ssub.s32 %s12, 2
        // Predicated region
        $region48: #{tpu_custom_call.1} parent=46 // pred_check
          %p446 = pneg %p144
        $region49: #{tpu_custom_call.1} parent=46 // pred_check_branch
          %448 = sbr.rel (%p446) target = $region51
        $region50: #{tpu_custom_call.1} parent=46 // pred_region
          %s449 = sand.u32 %s129, 1
          %s450 = scalar_lea.sflag [#allocation3], %s449
          %s451 = sand.u32 %s129, 1
          %s452 = smul.addr %s451, 224
          %s453 = scalar_lea.vmem [#allocation2], %s452
          %454 = dma.done %s450, 3584
        $region51: #{tpu_custom_call.1} parent=46 // pred_fallthru
          _
      $region47: #{tpu_custom_call.1} parent=5 // pred_fallthru
        _
    $region6: #{tpu_custom_call.1} parent=1 // loop_footer
      %s16 = sadd.s32 1, %s12
    $region7: #{tpu_custom_call.1} parent=1 // loop_footer_branch
      %11 = sbr.rel target = $region3
    $region8: #{tpu_custom_call.1} parent=1 // loop_exit
      _
    %455 = vsyncpa [#allocation3], 1
    %s456 = scalar_lea.sflag [#allocation3], 1
    %457 = vsyncpa %s456, 1

</llo_original>
